<compile_context>
chip_gen: v7x
topology: tpu7x:2x2x1
jax: 0.10.0
libtpu: 0.0.40
codegen_flags: <defaults>
</compile_context>

<pallas_src>
import functools

import jax
import jax.numpy as jnp
from jax.experimental import pallas as pl
from jax.experimental.pallas import tpu as pltpu

LANE = 128  # TPU lane width; feature dims are padded to this.


def _round_up(x, m):
    return ((x + m - 1) // m) * m


def fused_gcn_kernel(a_ref, xw1_ref, w2_ref, b1_ref, b2_ref, o_ref,
                     acc_ref, xw2_ref, *, tm, tk):
    """Two fused GraphConv layers.

    grid = (phase p, row tile i, reduction tile k):
      p==0:  acc += A[i,k] @ XW1[k]      ; at k==last:
             h1 = relu(acc + b1); xw2[i] = h1 @ W2   (layer 1 + feature xform)
      p==1:  acc += A[i,k] @ xw2[k]      ; at k==last:
             out[i] = acc + b2                        (layer 2)
    """
    p = pl.program_id(0)
    i = pl.program_id(1)
    k = pl.program_id(2)
    nk = pl.num_programs(2)

    @pl.when(k == 0)
    def _():
        acc_ref[...] = jnp.zeros_like(acc_ref)

    @pl.when(p == 0)
    def _():
        acc_ref[...] += jnp.dot(a_ref[...], xw1_ref[...],
                                preferred_element_type=jnp.float32)

    @pl.when(p == 1)
    def _():
        row = pl.multiple_of(k * tk, tk)
        acc_ref[...] += jnp.dot(a_ref[...], xw2_ref[pl.ds(row, tk), :],
                                preferred_element_type=jnp.float32)

    # Layer-1 finalize: relu(A@XW1 + b1), then stash (h1 @ W2) for phase 1.
    @pl.when((p == 0) & (k == nk - 1))
    def _():
        h1 = jnp.maximum(acc_ref[...] + b1_ref[...], 0.0)
        row = pl.multiple_of(i * tm, tm)
        xw2_ref[pl.ds(row, tm), :] = jnp.dot(
            h1.astype(jnp.bfloat16), w2_ref[...],
            preferred_element_type=jnp.float32).astype(xw2_ref.dtype)
        # Phase-0 writeback of this output tile is dead (phase 1 overwrites
        # it); keep the buffer deterministic.
        o_ref[...] = jnp.zeros_like(o_ref)

    # Layer-2 finalize: out = A@(h1@W2) + b2 (dropout is identity in eval).
    @pl.when((p == 1) & (k == nk - 1))
    def _():
        o_ref[...] = (acc_ref[...] + b2_ref[...]).astype(o_ref.dtype)


def gcn_flatten_emp_forward(a_hat, features, params, *, tile=None):
    """Full forward pass of GCN_flatten_emp (eval mode, float32 policy)."""
    w1, b1, w2, b2 = params
    n = a_hat.shape[0]
    hid = w1.shape[1]
    out_size = w2.shape[1]

    # MXU-friendly square tiles over A_hat: 256 keeps the 256-deep MXU of
    # v6e/v7x full and is a 128-multiple (fine on v5e). Tiny graphs use 128.
    if tile is None:
        tile = 128 if n <= 128 else 256
    tm = tk = tile
    n_pad = _round_up(n, tile)
    fdim = max(_round_up(hid, LANE), _round_up(out_size, LANE))

    # Layer-1 feature transform, done once outside the kernel (only
    # (N, Fin) @ (Fin, hid)); the kernel streams its rows per k-tile.
    xw1 = jnp.dot(features.astype(jnp.float32), w1.astype(jnp.float32))

    # Zero-pad to lane-dense shapes; cast MXU operands to bf16 (f32 accumulate).
    a_p = jnp.zeros((n_pad, n_pad), jnp.bfloat16).at[:n, :n].set(
        a_hat.astype(jnp.bfloat16))
    xw1_p = jnp.zeros((n_pad, fdim), jnp.bfloat16).at[:n, :hid].set(
        xw1.astype(jnp.bfloat16))
    w2_p = jnp.zeros((fdim, fdim), jnp.bfloat16).at[:hid, :out_size].set(
        w2.astype(jnp.bfloat16))
    b1_p = jnp.zeros((1, fdim), jnp.float32).at[0, :hid].set(
        b1.astype(jnp.float32))
    b2_p = jnp.zeros((1, fdim), jnp.float32).at[0, :out_size].set(
        b2.astype(jnp.float32))

    grid = (2, n_pad // tm, n_pad // tk)

    out_padded = pl.pallas_call(
        functools.partial(fused_gcn_kernel, tm=tm, tk=tk),
        out_shape=jax.ShapeDtypeStruct((n_pad, fdim), jnp.float32),
        grid_spec=pltpu.PrefetchScalarGridSpec(
            num_scalar_prefetch=0,
            grid=grid,
            in_specs=[
                # A_hat tile; the same (i,k) tiling serves both phases.
                pl.BlockSpec((tm, tk), lambda p, i, k: (i, k)),
                # XW1 row-tile; only used in phase 0 -> pin to block 0 in
                # phase 1 so it is not re-fetched every step.
                pl.BlockSpec((tk, fdim), lambda p, i, k: ((1 - p) * k, 0)),
                # W2 / b1 / b2: small, fully VMEM-resident across the grid.
                pl.BlockSpec((fdim, fdim), lambda p, i, k: (0, 0)),
                pl.BlockSpec((1, fdim), lambda p, i, k: (0, 0)),
                pl.BlockSpec((1, fdim), lambda p, i, k: (0, 0)),
            ],
            out_specs=pl.BlockSpec((tm, fdim), lambda p, i, k: (i, 0)),
            scratch_shapes=[
                pltpu.VMEM((tm, fdim), jnp.float32),      # f32 accumulator
                pltpu.VMEM((n_pad, fdim), jnp.bfloat16),  # layer-2 operand h1@W2
            ],
        ),
        compiler_params=pltpu.CompilerParams(
            # Row axis must stay sequential: the fused design shares the
            # layer-1 activation scratch across row tiles and phases.
            dimension_semantics=("arbitrary", "arbitrary", "arbitrary"),
        ),
    )(a_p, xw1_p, w2_p, b1_p, b2_p)

    # TODO(synk): dropout1/dropout2 (p=0.5) are identity in eval mode and the
    # '00000' precision policy makes every cast branch a no-op; not emitted.
    return out_padded[:n, :out_size]


def build_normalized_adjacency(key, n):
    """Deterministic synthetic symmetric graph with self-loops, DGL 'both' norm."""
    probs = jax.random.uniform(key, (n, n))
    adj = (probs > 0.7).astype(jnp.float32)
    adj = jnp.maximum(adj, adj.T)                           # symmetric
    adj = jnp.maximum(adj, jnp.eye(n, dtype=jnp.float32))   # self-loops
    deg = jnp.sum(adj, axis=1)
    d_inv_sqrt = 1.0 / jnp.sqrt(deg)
    return adj * d_inv_sqrt[:, None] * d_inv_sqrt[None, :]


def init_params(key, in_size, hid_size, out_size):
    k1, k2, k3, k4 = jax.random.split(key, 4)
    # Glorot-uniform like DGL's GraphConv weight init; small random biases to
    # exercise the bias path.
    lim1 = (6.0 / (in_size + hid_size)) ** 0.5
    lim2 = (6.0 / (hid_size + out_size)) ** 0.5
    w1 = jax.random.uniform(k1, (in_size, hid_size), jnp.float32, -lim1, lim1)
    w2 = jax.random.uniform(k2, (hid_size, out_size), jnp.float32, -lim2, lim2)
    b1 = 0.1 * jax.random.normal(k3, (hid_size,), jnp.float32)
    b2 = 0.1 * jax.random.normal(k4, (out_size,), jnp.float32)
    return (w1, b1, w2, b2)


if __name__ == "__main__":
    N = 16          # nodes
    IN_SIZE = 8
    HID_SIZE = 32
    OUT_SIZE = 8

    key = jax.random.PRNGKey(0)
    k_graph, k_feat, k_param = jax.random.split(key, 3)

    a_hat = build_normalized_adjacency(k_graph, N)
    features = jax.random.normal(k_feat, (N, IN_SIZE), jnp.float32)
    params = init_params(k_param, IN_SIZE, HID_SIZE, OUT_SIZE)

    out = jax.jit(gcn_flatten_emp_forward)(a_hat, features, params)
    out = jax.block_until_ready(out)
    assert out.shape == (N, OUT_SIZE)

    w1, b1, w2, b2 = params

    # Reference 1: same math with the kernel's bf16 operand quantization
    # (f32 accumulation) -> validates fusion / tiling / padding tightly.
    def dq(v):
        return v.astype(jnp.bfloat16).astype(jnp.float32)

    a_q = dq(a_hat)
    h1 = jnp.maximum(a_q @ dq(features @ w1) + b1, 0.0)
    xw2_q = dq(dq(h1) @ dq(w2))
    ref_q = a_q @ xw2_q + b2
    assert jnp.allclose(out, ref_q, atol=5e-3, rtol=5e-3)

    # Reference 2: pure float32 module math (loose bound on the bf16 error).
    ref = a_hat @ (features @ w1) + b1
    ref = jnp.maximum(ref, 0.0)
    ref = a_hat @ (ref @ w2) + b2
    assert jnp.allclose(out, ref, atol=1e-1, rtol=1e-1)

    print("KERNEL_OK")
</pallas_src>

<mosaic_0001>
module attributes {stable_mosaic.version = 11 : i64} {
  func.func @fused_gcn_kernel(%arg0: i32, %arg1: i32, %arg2: i32, %arg3: memref<128x128xbf16, #tpu.memory_space<vmem>>, %arg4: memref<128x128xbf16, #tpu.memory_space<vmem>>, %arg5: memref<128x128xbf16, #tpu.memory_space<vmem>>, %arg6: memref<1x128xf32, #tpu.memory_space<vmem>>, %arg7: memref<1x128xf32, #tpu.memory_space<vmem>>, %arg8: memref<128x128xf32, #tpu.memory_space<vmem>>, %arg9: memref<128x128xf32, #tpu.memory_space<vmem>>, %arg10: memref<128x128xbf16, #tpu.memory_space<vmem>>) attributes {dimension_semantics = [#tpu.dimension_semantics<arbitrary>, #tpu.dimension_semantics<arbitrary>, #tpu.dimension_semantics<arbitrary>], iteration_bounds = array<i64: 2, 1, 1>, scalar_prefetch = 0 : i64, scratch_operands = 2 : i64, tpu.core_type = #tpu.core_type<tc>, window_params = [{transform_indices = @transform_0, window_bounds = array<i64: 128, 128>}, {transform_indices = @transform_1, window_bounds = array<i64: 128, 128>}, {pipeline_mode = #tpu.pipeline_mode<synchronous>, transform_indices = @transform_2, window_bounds = array<i64: 128, 128>}, {pipeline_mode = #tpu.pipeline_mode<synchronous>, transform_indices = @transform_3, window_bounds = array<i64: 1, 128>}, {pipeline_mode = #tpu.pipeline_mode<synchronous>, transform_indices = @transform_4, window_bounds = array<i64: 1, 128>}, {transform_indices = @transform_5, window_bounds = array<i64: 128, 128>}]} {
    %c0_i32 = arith.constant 0 : i32
    %0 = arith.cmpi eq, %arg2, %c0_i32 : i32
    %1 = arith.extui %0 : i1 to i32
    %c0_i32_0 = arith.constant 0 : i32
    %2 = arith.cmpi ne, %1, %c0_i32_0 : i32
    scf.if %2 {
      %cst = arith.constant 0.000000e+00 : f32
      %19 = vector.broadcast %cst : f32 to vector<128x128xf32>
      %c0 = arith.constant 0 : index
      %c0_10 = arith.constant 0 : index
      %20 = vector.load %arg9[%c0, %c0_10] : memref<128x128xf32, #tpu.memory_space<vmem>>, vector<128x128xf32>
      tpu.vector_store %arg9[%c0, %c0_10], %19 {strides = array<i32>} : memref<128x128xf32, #tpu.memory_space<vmem>>, vector<128x128xf32>,
    } else {
    }
    %c0_i32_1 = arith.constant 0 : i32
    %3 = arith.cmpi eq, %arg0, %c0_i32_1 : i32
    %4 = arith.extui %3 : i1 to i32
    %c0_i32_2 = arith.constant 0 : i32
    %5 = arith.cmpi ne, %4, %c0_i32_2 : i32
    scf.if %5 {
      %c0 = arith.constant 0 : index
      %c0_10 = arith.constant 0 : index
      %19 = vector.load %arg9[%c0, %c0_10] : memref<128x128xf32, #tpu.memory_space<vmem>>, vector<128x128xf32>
      %c0_11 = arith.constant 0 : index
      %c0_12 = arith.constant 0 : index
      %20 = vector.load %arg3[%c0_11, %c0_12] : memref<128x128xbf16, #tpu.memory_space<vmem>>, vector<128x128xbf16>
      %c0_13 = arith.constant 0 : index
      %c0_14 = arith.constant 0 : index
      %21 = vector.load %arg4[%c0_13, %c0_14] : memref<128x128xbf16, #tpu.memory_space<vmem>>, vector<128x128xbf16>
      %cst = arith.constant dense<0.000000e+00> : vector<128x128xf32>
      %22 = tpu.matmul %20, %21, %cst {dimension_numbers = #tpu.dot_dimension_numbers<[1], [0], [0], [1], [0, 0, 1, 1], [], []>} : vector<128x128xbf16>, vector<128x128xbf16>, vector<128x128xf32> -> vector<128x128xf32>
      %23 = arith.addf %19, %22 : vector<128x128xf32>
      %c0_15 = arith.constant 0 : index
      %c0_16 = arith.constant 0 : index
      %24 = vector.load %arg9[%c0_15, %c0_16] : memref<128x128xf32, #tpu.memory_space<vmem>>, vector<128x128xf32>
      tpu.vector_store %arg9[%c0_15, %c0_16], %23 {strides = array<i32>} : memref<128x128xf32, #tpu.memory_space<vmem>>, vector<128x128xf32>,
    } else {
    }
    %c1_i32 = arith.constant 1 : i32
    %6 = arith.cmpi eq, %arg0, %c1_i32 : i32
    %7 = arith.extui %6 : i1 to i32
    %c0_i32_3 = arith.constant 0 : i32
    %8 = arith.cmpi ne, %7, %c0_i32_3 : i32
    scf.if %8 {
      %c128_i32 = arith.constant 128 : i32
      %19 = arith.muli %arg2, %c128_i32 : i32
      %20 = tpu.assume_multiple %19, 128 : i32
      %c0 = arith.constant 0 : index
      %c0_10 = arith.constant 0 : index
      %21 = vector.load %arg9[%c0, %c0_10] : memref<128x128xf32, #tpu.memory_space<vmem>>, vector<128x128xf32>
      %c0_11 = arith.constant 0 : index
      %c0_12 = arith.constant 0 : index
      %22 = vector.load %arg3[%c0_11, %c0_12] : memref<128x128xbf16, #tpu.memory_space<vmem>>, vector<128x128xbf16>
      %23 = arith.index_cast %20 : i32 to index
      %c0_13 = arith.constant 0 : index
      %24 = vector.load %arg10[%23, %c0_13] : memref<128x128xbf16, #tpu.memory_space<vmem>>, vector<128x128xbf16>
      %cst = arith.constant dense<0.000000e+00> : vector<128x128xf32>
      %25 = tpu.matmul %22, %24, %cst {dimension_numbers = #tpu.dot_dimension_numbers<[1], [0], [0], [1], [0, 0, 1, 1], [], []>} : vector<128x128xbf16>, vector<128x128xbf16>, vector<128x128xf32> -> vector<128x128xf32>
      %26 = arith.addf %21, %25 : vector<128x128xf32>
      %c0_14 = arith.constant 0 : index
      %c0_15 = arith.constant 0 : index
      %27 = vector.load %arg9[%c0_14, %c0_15] : memref<128x128xf32, #tpu.memory_space<vmem>>, vector<128x128xf32>
      tpu.vector_store %arg9[%c0_14, %c0_15], %26 {strides = array<i32>} : memref<128x128xf32, #tpu.memory_space<vmem>>, vector<128x128xf32>,
    } else {
    }
    %c0_i32_4 = arith.constant 0 : i32
    %9 = arith.cmpi eq, %arg0, %c0_i32_4 : i32
    %c0_i32_5 = arith.constant 0 : i32
    %10 = arith.cmpi eq, %arg2, %c0_i32_5 : i32
    %11 = arith.andi %9, %10 : i1
    %12 = arith.extui %11 : i1 to i32
    %c0_i32_6 = arith.constant 0 : i32
    %13 = arith.cmpi ne, %12, %c0_i32_6 : i32
    scf.if %13 {
      %c0 = arith.constant 0 : index
      %c0_10 = arith.constant 0 : index
      %19 = vector.load %arg9[%c0, %c0_10] : memref<128x128xf32, #tpu.memory_space<vmem>>, vector<128x128xf32>
      %c0_11 = arith.constant 0 : index
      %c0_12 = arith.constant 0 : index
      %20 = vector.load %arg6[%c0_11, %c0_12] : memref<1x128xf32, #tpu.memory_space<vmem>>, vector<1x128xf32>
      %21 = vector.broadcast %20 : vector<1x128xf32> to vector<128x128xf32>
      %22 = arith.addf %19, %21 : vector<128x128xf32>
      %cst = arith.constant 0.000000e+00 : f32
      %23 = vector.broadcast %cst : f32 to vector<128x128xf32>
      %24 = arith.maximumf %22, %23 : vector<128x128xf32>
      %c128_i32 = arith.constant 128 : i32
      %25 = arith.muli %arg1, %c128_i32 : i32
      %26 = tpu.assume_multiple %25, 128 : i32
      %27 = arith.truncf %24 : vector<128x128xf32> to vector<128x128xbf16>
      %c0_13 = arith.constant 0 : index
      %c0_14 = arith.constant 0 : index
      %28 = vector.load %arg5[%c0_13, %c0_14] : memref<128x128xbf16, #tpu.memory_space<vmem>>, vector<128x128xbf16>
      %cst_15 = arith.constant dense<0.000000e+00> : vector<128x128xf32>
      %29 = tpu.matmul %27, %28, %cst_15 {dimension_numbers = #tpu.dot_dimension_numbers<[1], [0], [0], [1], [0, 0, 1, 1], [], []>} : vector<128x128xbf16>, vector<128x128xbf16>, vector<128x128xf32> -> vector<128x128xf32>
      %30 = arith.truncf %29 : vector<128x128xf32> to vector<128x128xbf16>
      %31 = arith.index_cast %26 : i32 to index
      %c0_16 = arith.constant 0 : index
      %32 = vector.load %arg10[%31, %c0_16] : memref<128x128xbf16, #tpu.memory_space<vmem>>, vector<128x128xbf16>
      tpu.vector_store %arg10[%31, %c0_16], %30 {strides = array<i32>} : memref<128x128xbf16, #tpu.memory_space<vmem>>, vector<128x128xbf16>,
      %cst_17 = arith.constant 0.000000e+00 : f32
      %33 = vector.broadcast %cst_17 : f32 to vector<128x128xf32>
      %c0_18 = arith.constant 0 : index
      %c0_19 = arith.constant 0 : index
      %34 = vector.load %arg8[%c0_18, %c0_19] : memref<128x128xf32, #tpu.memory_space<vmem>>, vector<128x128xf32>
      tpu.vector_store %arg8[%c0_18, %c0_19], %33 {strides = array<i32>} : memref<128x128xf32, #tpu.memory_space<vmem>>, vector<128x128xf32>,
    } else {
    }
    %c1_i32_7 = arith.constant 1 : i32
    %14 = arith.cmpi eq, %arg0, %c1_i32_7 : i32
    %c0_i32_8 = arith.constant 0 : i32
    %15 = arith.cmpi eq, %arg2, %c0_i32_8 : i32
    %16 = arith.andi %14, %15 : i1
    %17 = arith.extui %16 : i1 to i32
    %c0_i32_9 = arith.constant 0 : i32
    %18 = arith.cmpi ne, %17, %c0_i32_9 : i32
    scf.if %18 {
      %c0 = arith.constant 0 : index
      %c0_10 = arith.constant 0 : index
      %19 = vector.load %arg9[%c0, %c0_10] : memref<128x128xf32, #tpu.memory_space<vmem>>, vector<128x128xf32>
      %c0_11 = arith.constant 0 : index
      %c0_12 = arith.constant 0 : index
      %20 = vector.load %arg7[%c0_11, %c0_12] : memref<1x128xf32, #tpu.memory_space<vmem>>, vector<1x128xf32>
      %21 = vector.broadcast %20 : vector<1x128xf32> to vector<128x128xf32>
      %22 = arith.addf %19, %21 : vector<128x128xf32>
      %c0_13 = arith.constant 0 : index
      %c0_14 = arith.constant 0 : index
      %23 = vector.load %arg8[%c0_13, %c0_14] : memref<128x128xf32, #tpu.memory_space<vmem>>, vector<128x128xf32>
      tpu.vector_store %arg8[%c0_13, %c0_14], %22 {strides = array<i32>} : memref<128x128xf32, #tpu.memory_space<vmem>>, vector<128x128xf32>,
    } else {
    }
    return
  }
  func.func @transform_0(%arg0: i32, %arg1: i32, %arg2: i32) -> (i32, i32) {
    %c0_i32 = arith.constant 0 : i32
    return %arg1, %arg2 : i32, i32
  }
  func.func @transform_1(%arg0: i32, %arg1: i32, %arg2: i32) -> (i32, i32) {
    %c1_i32 = arith.constant 1 : i32
    %0 = arith.subi %c1_i32, %arg0 : i32
    %1 = arith.muli %0, %arg2 : i32
    %c0_i32 = arith.constant 0 : i32
    %c0_i32_0 = arith.constant 0 : i32
    return %1, %c0_i32 : i32, i32
  }
  func.func @transform_2(%arg0: i32, %arg1: i32, %arg2: i32) -> (i32, i32) {
    %c0_i32 = arith.constant 0 : i32
    %c0_i32_0 = arith.constant 0 : i32
    %c0_i32_1 = arith.constant 0 : i32
    return %c0_i32, %c0_i32_0 : i32, i32
  }
  func.func @transform_3(%arg0: i32, %arg1: i32, %arg2: i32) -> (i32, i32) {
    %c0_i32 = arith.constant 0 : i32
    %c0_i32_0 = arith.constant 0 : i32
    %c0_i32_1 = arith.constant 0 : i32
    return %c0_i32, %c0_i32_0 : i32, i32
  }
  func.func @transform_4(%arg0: i32, %arg1: i32, %arg2: i32) -> (i32, i32) {
    %c0_i32 = arith.constant 0 : i32
    %c0_i32_0 = arith.constant 0 : i32
    %c0_i32_1 = arith.constant 0 : i32
    return %c0_i32, %c0_i32_0 : i32, i32
  }
  func.func @transform_5(%arg0: i32, %arg1: i32, %arg2: i32) -> (i32, i32) {
    %c0_i32 = arith.constant 0 : i32
    %c0_i32_0 = arith.constant 0 : i32
    return %arg1, %c0_i32 : i32, i32
  }
}

</mosaic_0001>

<llo_original>
// kernel: gcn_flatten_emp_forward.1
$region0: #{gcn_flatten_emp_forward.1}
  #allocation0 [shape = 'u32[]', space=smem, size = 0x4, offset = 0x4, fixed_abs, tag = 'smem constant byte address 0x4 - core index']
  #allocation1 [shape = 'u32[144,128]{1,0:T(1,128)}', space=vmem, size = 0x12000, scoped, tag = 'internal scratch']
  #allocation2 [shape = 'f32[128,128]{1,0:T(8,128)}', space=vmem, size = 0x10000, scoped, tag = 'scratch operand']
  #allocation3 [shape = 'bf16[128,128]{1,0:T(16,128)(2,1)}', space=vmem, size = 0x8000, scoped, tag = 'scratch operand']
  %s0 = inlined_call_operand.vmem [shape: bf16[128,128], index: 0, kind: input, shape index: {}]
  %s1 = inlined_call_operand.vmem [shape: bf16[128,128], index: 1, kind: input, shape index: {}]
  %s2 = inlined_call_operand.vmem [shape: bf16[128,128], index: 2, kind: input, shape index: {}]
  %s3 = inlined_call_operand.vmem [shape: f32[1,128], index: 3, kind: input, shape index: {}]
  %s4 = inlined_call_operand.vmem [shape: f32[1,128], index: 4, kind: input, shape index: {}]
  %s5 = inlined_call_operand.vmem [shape: f32[128,128], index: 5, kind: output, shape index: {}]
  %s6 = sld [smem:[#allocation0]]
  $region73: #{gcn_flatten_emp_forward.1} parent=0
    _
  %s8 = ssub.s32 1, %s6
  %s9 = scalar_select 0, %s8, %s6
  loop: start=0, step=1, limit=4
  $region2: #{gcn_flatten_emp_forward.1} parent=0 // loop_pre_header
    _
  $region3: #{gcn_flatten_emp_forward.1} parent=0 // loop_header
    %s11 = sphi 0, %s15
    %p12 = scmp.ge.s32.totalorder %s11, 4
    %s18 = sphi 0, %s37
    %s19 = sphi 0, %s33
    %s20 = sphi 0, %s29
    %s21 = sphi 0, %s18
    %s22 = sphi 0, %s19
    %s23 = sphi 0, %s20
    %s24 = sphi 0, %s21
    %s25 = sphi 0, %s22
    %s26 = sphi 0, %s23
    %s42 = sphi 0, %s44
    %s45 = sphi 0, %s42
    %s46 = sphi 0, %s45
    %s62 = sphi 0, %s46
    %s72 = sphi 0, %s74
    %s75 = sphi 0, %s72
    %s76 = sphi 0, %s75
    %s92 = sphi 0, %s76
    %s96 = sphi 0, %s96
    %s98 = sphi 0, %s96
    %s99 = sphi 0, %s98
    %s113 = sphi 0, %s99
    %s117 = sphi 0, %s117
    %s119 = sphi 0, %s117
    %s120 = sphi 0, %s119
    %s134 = sphi 0, %s120
    %s138 = sphi 0, %s138
    %s140 = sphi 0, %s138
    %s141 = sphi 0, %s140
    %s155 = sphi 0, %s141
    %s161 = sphi 0, %s163
    %s164 = sphi 0, %s161
    %s165 = sphi 0, %s164
    %s181 = sphi 0, %s165
  $region4: #{gcn_flatten_emp_forward.1} parent=0 // loop_header_branch
    %14 = sbr.rel (%p12) target = $region8
  $region5: #{gcn_flatten_emp_forward.1} parent=0 // loop_body
    %s16 = ssub.s32 %s11, 1
    %s17 = ssub.s32 %s11, 2
    %s27 = sadd.s32 1, %s20
    %p28 = scmp.ge.s32.totalorder %s27, 1
    %s29 = scalar_select %p28, 0, %s27
    %s30 = sadd.s32 1, %s19
    %s31 = scalar_select %p28, %s30, %s19
    %p32 = scmp.ge.s32.totalorder %s31, 1
    %s33 = scalar_select %p32, 0, %s31
    %s34 = sadd.s32 1, %s18
    %s35 = scalar_select %p32, %s34, %s18
    %p36 = scmp.ge.s32.totalorder %s35, 2
    %s37 = scalar_select %p36, 0, %s35
    %s38 = ssub.s32 %s19, %s33
    %s39 = ssub.s32 %s20, %s29
    %s40 = sor.u32 %s38, %s39
    %p41 = scmp.eq.s32.totalorder %s40, 0
    %s43 = sadd.s32 %s42, 1
    %s44 = scalar_select %p41, %s42, %s43
    %p47 = pneg %p41
    %p48 = scmp.eq.s32.totalorder %s11, 1
    %p49 = por %p47, %p48
    %p50 = scmp.ne.s32.totalorder %s42, %s45
    %p51 = scmp.eq.s32.totalorder %s11, 0
    %p52 = por %p50, %p51
    %p53 = scmp.ne.s32.totalorder %s42, %s45
    %p54 = scmp.eq.s32.totalorder %s16, 1
    %p55 = por %p53, %p54
    %p56 = scmp.ne.s32.totalorder %s45, %s46
    %p57 = scmp.eq.s32.totalorder %s16, 0
    %p58 = por %p56, %p57
    %p59 = scmp.ne.s32.totalorder %s45, %s46
    %p60 = scmp.eq.s32.totalorder %s17, 1
    %p61 = por %p59, %p60
    %p63 = scmp.ne.s32.totalorder %s46, %s62
    %p64 = scmp.eq.s32.totalorder %s17, 0
    %p65 = por %p63, %p64
    %s66 = ssub.s32 1, %s18
    %s67 = smul.u32 %s66, %s20
    %s68 = ssub.s32 1, %s37
    %s69 = smul.u32 %s68, %s29
    %s70 = ssub.s32 %s67, %s69
    %p71 = scmp.eq.s32.totalorder %s70, 0
    %s73 = sadd.s32 %s72, 1
    %s74 = scalar_select %p71, %s72, %s73
    %p77 = pneg %p71
    %p78 = scmp.eq.s32.totalorder %s11, 1
    %p79 = por %p77, %p78
    %p80 = scmp.ne.s32.totalorder %s72, %s75
    %p81 = scmp.eq.s32.totalorder %s11, 0
    %p82 = por %p80, %p81
    %p83 = scmp.ne.s32.totalorder %s72, %s75
    %p84 = scmp.eq.s32.totalorder %s16, 1
    %p85 = por %p83, %p84
    %p86 = scmp.ne.s32.totalorder %s75, %s76
    %p87 = scmp.eq.s32.totalorder %s16, 0
    %p88 = por %p86, %p87
    %p89 = scmp.ne.s32.totalorder %s75, %s76
    %p90 = scmp.eq.s32.totalorder %s17, 1
    %p91 = por %p89, %p90
    %p93 = scmp.ne.s32.totalorder %s76, %s92
    %p94 = scmp.eq.s32.totalorder %s17, 0
    %p95 = por %p93, %p94
    %s97 = sadd.s32 %s96, 1
    %p100 = scmp.eq.s32.totalorder %s11, 1
    %p101 = scmp.ne.s32.totalorder %s96, %s98
    %p102 = scmp.eq.s32.totalorder %s11, 0
    %p103 = por %p101, %p102
    %p104 = scmp.ne.s32.totalorder %s96, %s98
    %p105 = scmp.eq.s32.totalorder %s16, 1
    %p106 = por %p104, %p105
    %p107 = scmp.ne.s32.totalorder %s98, %s99
    %p108 = scmp.eq.s32.totalorder %s16, 0
    %p109 = por %p107, %p108
    %p110 = scmp.ne.s32.totalorder %s98, %s99
    %p111 = scmp.eq.s32.totalorder %s17, 1
    %p112 = por %p110, %p111
    %p114 = scmp.ne.s32.totalorder %s99, %s113
    %p115 = scmp.eq.s32.totalorder %s17, 0
    %p116 = por %p114, %p115
    %s118 = sadd.s32 %s117, 1
    %p121 = scmp.eq.s32.totalorder %s11, 1
    %p122 = scmp.ne.s32.totalorder %s117, %s119
    %p123 = scmp.eq.s32.totalorder %s11, 0
    %p124 = por %p122, %p123
    %p125 = scmp.ne.s32.totalorder %s117, %s119
    %p126 = scmp.eq.s32.totalorder %s16, 1
    %p127 = por %p125, %p126
    %p128 = scmp.ne.s32.totalorder %s119, %s120
    %p129 = scmp.eq.s32.totalorder %s16, 0
    %p130 = por %p128, %p129
    %p131 = scmp.ne.s32.totalorder %s119, %s120
    %p132 = scmp.eq.s32.totalorder %s17, 1
    %p133 = por %p131, %p132
    %p135 = scmp.ne.s32.totalorder %s120, %s134
    %p136 = scmp.eq.s32.totalorder %s17, 0
    %p137 = por %p135, %p136
    %s139 = sadd.s32 %s138, 1
    %p142 = scmp.eq.s32.totalorder %s11, 1
    %p143 = scmp.ne.s32.totalorder %s138, %s140
    %p144 = scmp.eq.s32.totalorder %s11, 0
    %p145 = por %p143, %p144
    %p146 = scmp.ne.s32.totalorder %s138, %s140
    %p147 = scmp.eq.s32.totalorder %s16, 1
    %p148 = por %p146, %p147
    %p149 = scmp.ne.s32.totalorder %s140, %s141
    %p150 = scmp.eq.s32.totalorder %s16, 0
    %p151 = por %p149, %p150
    %p152 = scmp.ne.s32.totalorder %s140, %s141
    %p153 = scmp.eq.s32.totalorder %s17, 1
    %p154 = por %p152, %p153
    %p156 = scmp.ne.s32.totalorder %s141, %s155
    %p157 = scmp.eq.s32.totalorder %s17, 0
    %p158 = por %p156, %p157
    %s159 = ssub.s32 %s19, %s33
    %p160 = scmp.eq.s32.totalorder %s159, 0
    %s162 = sadd.s32 %s161, 1
    %s163 = scalar_select %p160, %s161, %s162
    %p166 = pneg %p160
    %p167 = scmp.eq.s32.totalorder %s11, 1
    %p168 = por %p166, %p167
    %p169 = scmp.ne.s32.totalorder %s161, %s164
    %p170 = scmp.eq.s32.totalorder %s11, 0
    %p171 = por %p169, %p170
    %p172 = scmp.ne.s32.totalorder %s161, %s164
    %p173 = scmp.eq.s32.totalorder %s16, 1
    %p174 = por %p172, %p173
    %p175 = scmp.ne.s32.totalorder %s164, %s165
    %p176 = scmp.eq.s32.totalorder %s16, 0
    %p177 = por %p175, %p176
    %p178 = scmp.ne.s32.totalorder %s164, %s165
    %p179 = scmp.eq.s32.totalorder %s17, 1
    %p180 = por %p178, %p179
    %p182 = scmp.ne.s32.totalorder %s165, %s181
    %p183 = scmp.eq.s32.totalorder %s17, 0
    %p184 = por %p182, %p183
    %p185 = scmp.le.s32.totalorder 1, %s11
    %p186 = scmp.lt.s32.totalorder %s11, 3
    %p187 = pnand %p185, %p186
    %p188 = pneg %p187
    // Predicated region
    $region9: #{gcn_flatten_emp_forward.1} parent=5 // pred_check
      _
    $region10: #{gcn_flatten_emp_forward.1} parent=5 // pred_check_branch
      %190 = sbr.rel (%p187) target = $region12
    $region11: #{gcn_flatten_emp_forward.1} parent=5 // pred_region
      %s191 = ssub.s32 %s11, 1
      // Predicated region
      $region13: #{gcn_flatten_emp_forward.1} parent=11 // pred_check
        %p192 = pneg %p58
      $region14: #{gcn_flatten_emp_forward.1} parent=11 // pred_check_branch
        %194 = sbr.rel (%p192) target = $region16
      $region15: #{gcn_flatten_emp_forward.1} parent=11 // pred_region
        %s195 = smul.u32 16, %s22
        %p196 = scmp.lt.s32.totalorder %s195, 15
        %s197 = scalar_select %p196, %s195, 15
        %p198 = scmp.lt.s32.totalorder %s23, 0
        %s199 = scalar_select %p198, %s23, 0
        %s200 = sadd.s32 %s199, %s197
        %s201 = smul.addr %s200, 4
        %s202 = scalar_lea.vmem %s0, %s201
        %s203 = smul.u32 16, %s22
      $region16: #{gcn_flatten_emp_forward.1} parent=11 // pred_fallthru
        _
      // Predicated region
      $region17: #{gcn_flatten_emp_forward.1} parent=11 // pred_check
        %p204 = pneg %p109
      $region18: #{gcn_flatten_emp_forward.1} parent=11 // pred_check_branch
        %206 = sbr.rel (%p204) target = $region20
      $region19: #{gcn_flatten_emp_forward.1} parent=11 // pred_region
        _
      $region20: #{gcn_flatten_emp_forward.1} parent=11 // pred_fallthru
        _
      // Predicated region
      $region21: #{gcn_flatten_emp_forward.1} parent=11 // pred_check
        %p207 = pneg %p130
      $region22: #{gcn_flatten_emp_forward.1} parent=11 // pred_check_branch
        %209 = sbr.rel (%p207) target = $region24
      $region23: #{gcn_flatten_emp_forward.1} parent=11 // pred_region
        _
      $region24: #{gcn_flatten_emp_forward.1} parent=11 // pred_fallthru
        _
      // Predicated region
      $region25: #{gcn_flatten_emp_forward.1} parent=11 // pred_check
        %p210 = pneg %p151
      $region26: #{gcn_flatten_emp_forward.1} parent=11 // pred_check_branch
        %212 = sbr.rel (%p210) target = $region28
      $region27: #{gcn_flatten_emp_forward.1} parent=11 // pred_region
        _
      $region28: #{gcn_flatten_emp_forward.1} parent=11 // pred_fallthru
        _
    $region12: #{gcn_flatten_emp_forward.1} parent=5 // pred_fallthru
      _
    %p213 = scmp.lt.s32.totalorder %s11, 2
    // Predicated region
    $region29: #{gcn_flatten_emp_forward.1} parent=5 // pred_check
      %p214 = pneg %p213
    $region30: #{gcn_flatten_emp_forward.1} parent=5 // pred_check_branch
      %216 = sbr.rel (%p214) target = $region32
    $region31: #{gcn_flatten_emp_forward.1} parent=5 // pred_region
      // Predicated region
      $region33: #{gcn_flatten_emp_forward.1} parent=31 // pred_check
        %p217 = pneg %p82
      $region34: #{gcn_flatten_emp_forward.1} parent=31 // pred_check_branch
        %219 = sbr.rel (%p217) target = $region36
      $region35: #{gcn_flatten_emp_forward.1} parent=31 // pred_region
        %s220 = ssub.s32 1, %s18
        %s221 = smul.u32 %s220, %s20
        %s222 = smul.u32 16, %s221
        %p223 = scmp.lt.s32.totalorder %s222, 15
        %s224 = scalar_select %p223, %s222, 15
        %s225 = smul.addr %s224, 4
        %s226 = scalar_lea.vmem %s1, %s225
        %s227 = ssub.s32 1, %s18
        %s228 = smul.u32 %s227, %s20
        %s229 = smul.u32 16, %s228
      $region36: #{gcn_flatten_emp_forward.1} parent=31 // pred_fallthru
        _
    $region32: #{gcn_flatten_emp_forward.1} parent=5 // pred_fallthru
      _
    %p230 = scmp.le.s32.totalorder 1, %s11
    %p231 = scmp.lt.s32.totalorder %s11, 3
    %p232 = pnand %p230, %p231
    %p233 = pneg %p232
    // Predicated region
    $region37: #{gcn_flatten_emp_forward.1} parent=5 // pred_check
      _
    $region38: #{gcn_flatten_emp_forward.1} parent=5 // pred_check_branch
      %235 = sbr.rel (%p232) target = $region40
    $region39: #{gcn_flatten_emp_forward.1} parent=5 // pred_region
      %s236 = ssub.s32 %s11, 1
      %s237 = smul.u32 16, %s22
      %p238 = scmp.lt.s32.totalorder %s237, 15
      %s239 = scalar_select %p238, %s237, 15
      %p240 = scmp.lt.s32.totalorder %s23, 0
      %s241 = scalar_select %p240, %s23, 0
      %s242 = sadd.s32 %s241, %s239
      %s243 = smul.addr %s242, 4
      %s244 = scalar_lea.vmem %s0, %s243
      %p245 = pneg %p58
      %p246 = pneg %p55
      %s247 = ssub.s32 1, %s21
      %s248 = smul.u32 %s247, %s23
      %s249 = smul.u32 16, %s248
      %p250 = scmp.lt.s32.totalorder %s249, 15
      %s251 = scalar_select %p250, %s249, 15
      %s252 = smul.addr %s251, 4
      %s253 = scalar_lea.vmem %s1, %s252
      %p254 = pneg %p88
      %p255 = pneg %p85
      %p256 = pneg %p109
      %p257 = pneg %p106
      %p258 = pneg %p130
      %p259 = pneg %p127
      %p260 = pneg %p151
      %p261 = pneg %p148
      %p262 = pneg %p177
      %p263 = pneg %p174
      %s264 = smul.u32 16, %s22
      %p265 = scmp.lt.s32.totalorder %s264, 15
      %s266 = scalar_select %p265, %s264, 15
      %s267 = smul.addr %s266, 8
      %s268 = scalar_lea.vmem %s5, %s267
      %s269 = smul.u32 16, %s22
      %p270 = scmp.lt.s32.totalorder %s269, 15
      %s271 = scalar_select %p270, %s269, 15
      %p272 = scmp.lt.s32.totalorder %s23, 0
      %s273 = scalar_select %p272, %s23, 0
      %s274 = sadd.s32 %s273, %s271
      %s275 = smul.addr %s274, 4
      %s276 = scalar_lea.vmem %s0, %s275
      %s277 = smul.u32 16, %s22
      %s278 = ssub.s32 1, %s21
      %s279 = smul.u32 %s278, %s23
      %s280 = smul.u32 16, %s279
      %p281 = scmp.lt.s32.totalorder %s280, 15
      %s282 = scalar_select %p281, %s280, 15
      %s283 = smul.addr %s282, 4
      %s284 = scalar_lea.vmem %s1, %s283
      %s285 = ssub.s32 1, %s21
      %s286 = smul.u32 %s285, %s23
      %s287 = smul.u32 16, %s286
      %s288 = smul.u32 16, %s22
      %p289 = scmp.lt.s32.totalorder %s288, 15
      %s290 = scalar_select %p289, %s288, 15
      %s291 = smul.addr %s290, 8
      %s292 = scalar_lea.vmem %s5, %s291
      %s293 = smul.u32 16, %s22
      %p295 = scmp.eq.s32.totalorder %s23, 0
      // Predicated region
      $region41: #{gcn_flatten_emp_forward.1} parent=39 // pred_check
        %p296 = pneg %p295
      $region42: #{gcn_flatten_emp_forward.1} parent=39 // pred_check_branch
        %298 = sbr.rel (%p296) target = $region44
      $region43: #{gcn_flatten_emp_forward.1} parent=39 // pred_region
        %299 = vst [vmem:[#allocation2] sm:$0xff] 0.0
        %300 = vst [vmem:[#allocation2 + $0x8] sm:$0xff] 0.0
        %301 = vst [vmem:[#allocation2 + $0x10] sm:$0xff] 0.0
        %302 = vst [vmem:[#allocation2 + $0x18] sm:$0xff] 0.0
        %303 = vst [vmem:[#allocation2 + $0x20] sm:$0xff] 0.0
        %304 = vst [vmem:[#allocation2 + $0x28] sm:$0xff] 0.0
        %305 = vst [vmem:[#allocation2 + $0x30] sm:$0xff] 0.0
        %306 = vst [vmem:[#allocation2 + $0x38] sm:$0xff] 0.0
        %307 = vst [vmem:[#allocation2 + $0x40] sm:$0xff] 0.0
        %308 = vst [vmem:[#allocation2 + $0x48] sm:$0xff] 0.0
        %309 = vst [vmem:[#allocation2 + $0x50] sm:$0xff] 0.0
        %310 = vst [vmem:[#allocation2 + $0x58] sm:$0xff] 0.0
        %311 = vst [vmem:[#allocation2 + $0x60] sm:$0xff] 0.0
        %312 = vst [vmem:[#allocation2 + $0x68] sm:$0xff] 0.0
        %313 = vst [vmem:[#allocation2 + $0x70] sm:$0xff] 0.0
        %314 = vst [vmem:[#allocation2 + $0x78] sm:$0xff] 0.0
      $region44: #{gcn_flatten_emp_forward.1} parent=39 // pred_fallthru
        _
      %p315 = scmp.eq.s32.totalorder %s21, 0
      // Predicated region
      $region45: #{gcn_flatten_emp_forward.1} parent=39 // pred_check
        %p316 = pneg %p315
      $region46: #{gcn_flatten_emp_forward.1} parent=39 // pred_check_branch
        %318 = sbr.rel (%p316) target = $region48
      $region47: #{gcn_flatten_emp_forward.1} parent=39 // pred_region
        %v319 = vld [vmem:[#allocation2] sm:$0xff]
        %v320 = vld [vmem:[#allocation2 + $0x8] sm:$0xff]
        %v321 = vld [vmem:[#allocation2 + $0x10] sm:$0xff]
        %v322 = vld [vmem:[#allocation2 + $0x18] sm:$0xff]
        %v323 = vld [vmem:[#allocation2 + $0x20] sm:$0xff]
        %v324 = vld [vmem:[#allocation2 + $0x28] sm:$0xff]
        %v325 = vld [vmem:[#allocation2 + $0x30] sm:$0xff]
        %v326 = vld [vmem:[#allocation2 + $0x38] sm:$0xff]
        %v327 = vld [vmem:[#allocation2 + $0x40] sm:$0xff]
        %v328 = vld [vmem:[#allocation2 + $0x48] sm:$0xff]
        %v329 = vld [vmem:[#allocation2 + $0x50] sm:$0xff]
        %v330 = vld [vmem:[#allocation2 + $0x58] sm:$0xff]
        %v331 = vld [vmem:[#allocation2 + $0x60] sm:$0xff]
        %v332 = vld [vmem:[#allocation2 + $0x68] sm:$0xff]
        %v333 = vld [vmem:[#allocation2 + $0x70] sm:$0xff]
        %v334 = vld [vmem:[#allocation2 + $0x78] sm:$0xff]
        %v335 = vld [vmem:[%s276] sm:$0xf]
        %v336 = vld [vmem:[%s276 + $0x4] sm:$0xf]
        %v337 = vld [vmem:[%s276 + $0x8] sm:$0xf]
        %v338 = vld [vmem:[%s276 + $0xc] sm:$0xf]
        %v339 = vld [vmem:[%s276 + $0x10] sm:$0xf]
        %v340 = vld [vmem:[%s276 + $0x14] sm:$0xf]
        %v341 = vld [vmem:[%s276 + $0x18] sm:$0xf]
        %v342 = vld [vmem:[%s276 + $0x1c] sm:$0xf]
        %v343 = vld [vmem:[%s276 + $0x20] sm:$0xf]
        %v344 = vld [vmem:[%s276 + $0x24] sm:$0xf]
        %v345 = vld [vmem:[%s276 + $0x28] sm:$0xf]
        %v346 = vld [vmem:[%s276 + $0x2c] sm:$0xf]
        %v347 = vld [vmem:[%s276 + $0x30] sm:$0xf]
        %v348 = vld [vmem:[%s276 + $0x34] sm:$0xf]
        %v349 = vld [vmem:[%s276 + $0x38] sm:$0xf]
        %v350 = vld [vmem:[%s276 + $0x3c] sm:$0xf]
        %v351 = vld [vmem:[%s284] sm:$0xf]
        %v352 = vld [vmem:[%s284 + $0x4] sm:$0xf]
        %v353 = vld [vmem:[%s284 + $0x8] sm:$0xf]
        %v354 = vld [vmem:[%s284 + $0xc] sm:$0xf]
        %v355 = vld [vmem:[%s284 + $0x10] sm:$0xf]
        %v356 = vld [vmem:[%s284 + $0x14] sm:$0xf]
        %v357 = vld [vmem:[%s284 + $0x18] sm:$0xf]
        %v358 = vld [vmem:[%s284 + $0x1c] sm:$0xf]
        %v359 = vld [vmem:[%s284 + $0x20] sm:$0xf]
        %v360 = vld [vmem:[%s284 + $0x24] sm:$0xf]
        %v361 = vld [vmem:[%s284 + $0x28] sm:$0xf]
        %v362 = vld [vmem:[%s284 + $0x2c] sm:$0xf]
        %v363 = vld [vmem:[%s284 + $0x30] sm:$0xf]
        %v364 = vld [vmem:[%s284 + $0x34] sm:$0xf]
        %v365 = vld [vmem:[%s284 + $0x38] sm:$0xf]
        %v366 = vld [vmem:[%s284 + $0x3c] sm:$0xf]
        %v383 = vunpack.c.l.b16 %v335
        %v384 = vunpack.c.l.b16 %v336
        %v385 = vunpack.c.l.b16 %v337
        %v386 = vunpack.c.l.b16 %v338
        %v387 = vunpack.c.l.b16 %v339
        %v388 = vunpack.c.l.b16 %v340
        %v389 = vunpack.c.l.b16 %v341
        %v390 = vunpack.c.l.b16 %v342
        %v391 = vunpack.c.l.b16 %v343
        %v392 = vunpack.c.l.b16 %v344
        %v393 = vunpack.c.l.b16 %v345
        %v394 = vunpack.c.l.b16 %v346
        %v395 = vunpack.c.l.b16 %v347
        %v396 = vunpack.c.l.b16 %v348
        %v397 = vunpack.c.l.b16 %v349
        %v398 = vunpack.c.l.b16 %v350
        %v399 = vpack.c.b16 %v384, %v383
        %v400 = vpack.c.b16 %v386, %v385
        %v401 = vpack.c.b16 %v388, %v387
        %v402 = vpack.c.b16 %v390, %v389
        %v403 = vpack.c.b16 %v392, %v391
        %v404 = vpack.c.b16 %v394, %v393
        %v405 = vpack.c.b16 %v396, %v395
        %v406 = vpack.c.b16 %v398, %v397
        %v431 = vunpack.c.l.b16 %v351
        %v432 = vunpack.c.l.b16 %v352
        %v433 = vunpack.c.l.b16 %v353
        %v434 = vunpack.c.l.b16 %v354
        %v435 = vunpack.c.l.b16 %v355
        %v436 = vunpack.c.l.b16 %v356
        %v437 = vunpack.c.l.b16 %v357
        %v438 = vunpack.c.l.b16 %v358
        %v439 = vunpack.c.l.b16 %v359
        %v440 = vunpack.c.l.b16 %v360
        %v441 = vunpack.c.l.b16 %v361
        %v442 = vunpack.c.l.b16 %v362
        %v443 = vunpack.c.l.b16 %v363
        %v444 = vunpack.c.l.b16 %v364
        %v445 = vunpack.c.l.b16 %v365
        %v446 = vunpack.c.l.b16 %v366
        %v447 = vpack.c.b16 %v432, %v431
        %v448 = vpack.c.b16 %v434, %v433
        %v449 = vpack.c.b16 %v436, %v435
        %v450 = vpack.c.b16 %v438, %v437
        %v451 = vpack.c.b16 %v440, %v439
        %v452 = vpack.c.b16 %v442, %v441
        %v453 = vpack.c.b16 %v444, %v443
        %v454 = vpack.c.b16 %v446, %v445
        %463 = vmatprep.subr.bf16.mxu0 0
        %464 = vmatpush1.bf16.msra.mxu0 %v447
        %465 = vmatprep.subr.bf16.mxu0 0
        %466 = vmatpush1.bf16.msra.mxu0 %v448
        %467 = vmatprep.subr.bf16.mxu0 0
        %468 = vmatpush1.bf16.msra.mxu0 %v449
        %469 = vmatprep.subr.bf16.mxu0 0
        %470 = vmatpush1.bf16.msra.mxu0 %v450
        %471 = vmatprep.subr.bf16.mxu0 0
        %472 = vmatpush1.bf16.msra.mxu0 %v451
        %473 = vmatprep.subr.bf16.mxu0 0
        %474 = vmatpush1.bf16.msra.mxu0 %v452
        %475 = vmatprep.subr.bf16.mxu0 0
        %476 = vmatpush1.bf16.msra.mxu0 %v453
        %477 = vmatprep.subr.bf16.mxu0 0
        %478 = vmatpush1.bf16.msra.mxu0 %v454
        %479 = vmatprep.subr.bf16.mxu0 0
        %480 = vmatpush1.bf16.msra.mxu0 0
        %481 = vmatprep.subr.bf16.mxu0 0
        %482 = vmatpush1.bf16.msra.mxu0 0
        %483 = vmatprep.subr.bf16.mxu0 0
        %484 = vmatpush1.bf16.msra.mxu0 0
        %485 = vmatprep.subr.bf16.mxu0 0
        %486 = vmatpush1.bf16.msra.mxu0 0
        %487 = vmatprep.subr.bf16.mxu0 0
        %488 = vmatpush1.bf16.msra.mxu0 0
        %489 = vmatprep.subr.bf16.mxu0 0
        %490 = vmatpush1.bf16.msra.mxu0 0
        %491 = vmatprep.subr.bf16.mxu0 0
        %492 = vmatpush1.bf16.msra.mxu0 0
        %493 = vmatprep.subr.bf16.mxu0 0
        %494 = vmatpush1.bf16.msra.mxu0 0
        %495 = vmatprep.mubr.bf16.mxu0 0
        %496 = vmatmul.mubr.bf16.gmra.mrb[0].mxu0 %v399
        %v497 = vpop.f32.mrb[0].mxu0
        %v498 = vadd.f32 0.0, %v497
        %v499 = vpop.f32.mrb[0].mxu0
        %v500 = vpop.f32.mrb[0].mxu0
        %v501 = vadd.f32 0.0, %v500
        %v502 = vpop.f32.mrb[0].mxu0
        %503 = vmatprep.mubr.bf16.mxu0 0
        %504 = vmatmul.mubr.bf16.gmra.mrb[0].mxu0 %v400
        %v505 = vpop.f32.mrb[0].mxu0
        %v506 = vadd.f32 0.0, %v505
        %v507 = vpop.f32.mrb[0].mxu0
        %v508 = vpop.f32.mrb[0].mxu0
        %v509 = vadd.f32 0.0, %v508
        %v510 = vpop.f32.mrb[0].mxu0
        %511 = vmatprep.mubr.bf16.mxu0 0
        %512 = vmatmul.mubr.bf16.gmra.mrb[0].mxu0 %v401
        %v513 = vpop.f32.mrb[0].mxu0
        %v514 = vadd.f32 0.0, %v513
        %v515 = vpop.f32.mrb[0].mxu0
        %v516 = vpop.f32.mrb[0].mxu0
        %v517 = vadd.f32 0.0, %v516
        %v518 = vpop.f32.mrb[0].mxu0
        %519 = vmatprep.mubr.bf16.mxu0 0
        %520 = vmatmul.mubr.bf16.gmra.mrb[0].mxu0 %v402
        %v521 = vpop.f32.mrb[0].mxu0
        %v522 = vadd.f32 0.0, %v521
        %v523 = vpop.f32.mrb[0].mxu0
        %v524 = vpop.f32.mrb[0].mxu0
        %v525 = vadd.f32 0.0, %v524
        %v526 = vpop.f32.mrb[0].mxu0
        %527 = vmatprep.mubr.bf16.mxu0 0
        %528 = vmatmul.mubr.bf16.gmra.mrb[0].mxu0 %v403
        %v529 = vpop.f32.mrb[0].mxu0
        %v530 = vadd.f32 0.0, %v529
        %v531 = vpop.f32.mrb[0].mxu0
        %v532 = vpop.f32.mrb[0].mxu0
        %v533 = vadd.f32 0.0, %v532
        %v534 = vpop.f32.mrb[0].mxu0
        %535 = vmatprep.mubr.bf16.mxu0 0
        %536 = vmatmul.mubr.bf16.gmra.mrb[0].mxu0 %v404
        %v537 = vpop.f32.mrb[0].mxu0
        %v538 = vadd.f32 0.0, %v537
        %v539 = vpop.f32.mrb[0].mxu0
        %v540 = vpop.f32.mrb[0].mxu0
        %v541 = vadd.f32 0.0, %v540
        %v542 = vpop.f32.mrb[0].mxu0
        %543 = vmatprep.mubr.bf16.mxu0 0
        %544 = vmatmul.mubr.bf16.gmra.mrb[0].mxu0 %v405
        %v545 = vpop.f32.mrb[0].mxu0
        %v546 = vadd.f32 0.0, %v545
        %v547 = vpop.f32.mrb[0].mxu0
        %v548 = vpop.f32.mrb[0].mxu0
        %v549 = vadd.f32 0.0, %v548
        %v550 = vpop.f32.mrb[0].mxu0
        %551 = vmatprep.mubr.bf16.mxu0 0
        %552 = vmatmul.mubr.bf16.gmra.mrb[0].mxu0 %v406
        %v553 = vpop.f32.mrb[0].mxu0
        %v554 = vadd.f32 0.0, %v553
        %v555 = vpop.f32.mrb[0].mxu0
        %v556 = vpop.f32.mrb[0].mxu0
        %v557 = vadd.f32 0.0, %v556
        %v558 = vpop.f32.mrb[0].mxu0
        %559 = vdwg.mxu0
        %v560 = vadd.f32 %v319, %v498
        %v561 = vadd.f32 %v320, %v501
        %v562 = vadd.f32 %v321, %v506
        %v563 = vadd.f32 %v322, %v509
        %v564 = vadd.f32 %v323, %v514
        %v565 = vadd.f32 %v324, %v517
        %v566 = vadd.f32 %v325, %v522
        %v567 = vadd.f32 %v326, %v525
        %v568 = vadd.f32 %v327, %v530
        %v569 = vadd.f32 %v328, %v533
        %v570 = vadd.f32 %v329, %v538
        %v571 = vadd.f32 %v330, %v541
        %v572 = vadd.f32 %v331, %v546
        %v573 = vadd.f32 %v332, %v549
        %v574 = vadd.f32 %v333, %v554
        %v575 = vadd.f32 %v334, %v557
        %576 = vst [vmem:[#allocation2] sm:$0xff] %v560
        %577 = vst [vmem:[#allocation2 + $0x8] sm:$0xff] %v561
        %578 = vst [vmem:[#allocation2 + $0x10] sm:$0xff] %v562
        %579 = vst [vmem:[#allocation2 + $0x18] sm:$0xff] %v563
        %580 = vst [vmem:[#allocation2 + $0x20] sm:$0xff] %v564
        %581 = vst [vmem:[#allocation2 + $0x28] sm:$0xff] %v565
        %582 = vst [vmem:[#allocation2 + $0x30] sm:$0xff] %v566
        %583 = vst [vmem:[#allocation2 + $0x38] sm:$0xff] %v567
        %584 = vst [vmem:[#allocation2 + $0x40] sm:$0xff] %v568
        %585 = vst [vmem:[#allocation2 + $0x48] sm:$0xff] %v569
        %586 = vst [vmem:[#allocation2 + $0x50] sm:$0xff] %v570
        %587 = vst [vmem:[#allocation2 + $0x58] sm:$0xff] %v571
        %588 = vst [vmem:[#allocation2 + $0x60] sm:$0xff] %v572
        %589 = vst [vmem:[#allocation2 + $0x68] sm:$0xff] %v573
        %590 = vst [vmem:[#allocation2 + $0x70] sm:$0xff] %v574
        %591 = vst [vmem:[#allocation2 + $0x78] sm:$0xff] %v575
      $region48: #{gcn_flatten_emp_forward.1} parent=39 // pred_fallthru
        _
      %p592 = scmp.eq.s32.totalorder %s21, 1
      // Predicated region
      $region49: #{gcn_flatten_emp_forward.1} parent=39 // pred_check
        %p593 = pneg %p592
      $region50: #{gcn_flatten_emp_forward.1} parent=39 // pred_check_branch
        %595 = sbr.rel (%p593) target = $region52
      $region51: #{gcn_flatten_emp_forward.1} parent=39 // pred_region
        %s596 = smul.u32 %s23, 128
        %v597 = vld [vmem:[#allocation2] sm:$0xff]
        %v598 = vld [vmem:[#allocation2 + $0x8] sm:$0xff]
        %v599 = vld [vmem:[#allocation2 + $0x10] sm:$0xff]
        %v600 = vld [vmem:[#allocation2 + $0x18] sm:$0xff]
        %v601 = vld [vmem:[#allocation2 + $0x20] sm:$0xff]
        %v602 = vld [vmem:[#allocation2 + $0x28] sm:$0xff]
        %v603 = vld [vmem:[#allocation2 + $0x30] sm:$0xff]
        %v604 = vld [vmem:[#allocation2 + $0x38] sm:$0xff]
        %v605 = vld [vmem:[#allocation2 + $0x40] sm:$0xff]
        %v606 = vld [vmem:[#allocation2 + $0x48] sm:$0xff]
        %v607 = vld [vmem:[#allocation2 + $0x50] sm:$0xff]
        %v608 = vld [vmem:[#allocation2 + $0x58] sm:$0xff]
        %v609 = vld [vmem:[#allocation2 + $0x60] sm:$0xff]
        %v610 = vld [vmem:[#allocation2 + $0x68] sm:$0xff]
        %v611 = vld [vmem:[#allocation2 + $0x70] sm:$0xff]
        %v612 = vld [vmem:[#allocation2 + $0x78] sm:$0xff]
        %v613 = vld [vmem:[%s276] sm:$0xf]
        %v614 = vld [vmem:[%s276 + $0x4] sm:$0xf]
        %v615 = vld [vmem:[%s276 + $0x8] sm:$0xf]
        %v616 = vld [vmem:[%s276 + $0xc] sm:$0xf]
        %v617 = vld [vmem:[%s276 + $0x10] sm:$0xf]
        %v618 = vld [vmem:[%s276 + $0x14] sm:$0xf]
        %v619 = vld [vmem:[%s276 + $0x18] sm:$0xf]
        %v620 = vld [vmem:[%s276 + $0x1c] sm:$0xf]
        %v621 = vld [vmem:[%s276 + $0x20] sm:$0xf]
        %v622 = vld [vmem:[%s276 + $0x24] sm:$0xf]
        %v623 = vld [vmem:[%s276 + $0x28] sm:$0xf]
        %v624 = vld [vmem:[%s276 + $0x2c] sm:$0xf]
        %v625 = vld [vmem:[%s276 + $0x30] sm:$0xf]
        %v626 = vld [vmem:[%s276 + $0x34] sm:$0xf]
        %v627 = vld [vmem:[%s276 + $0x38] sm:$0xf]
        %v628 = vld [vmem:[%s276 + $0x3c] sm:$0xf]
        %s629 = sshra.s32 %s596, 4
        %s630 = sand.u32 %s596, 15
        %s631 = smul.addr %s629, 8
        %s632 = scalar_lea.vmem [#allocation3], %s631
        %v633 = vld [vmem:[%s632] sm:$0xff]
        %v634 = vld [vmem:[%s632 + $0x8] sm:$0xff]
        %v635 = vld [vmem:[%s632 + $0x10] sm:$0xff]
        %v636 = vld [vmem:[%s632 + $0x18] sm:$0xff]
        %v637 = vld [vmem:[%s632 + $0x20] sm:$0xff]
        %v638 = vld [vmem:[%s632 + $0x28] sm:$0xff]
        %v639 = vld [vmem:[%s632 + $0x30] sm:$0xff]
        %v640 = vld [vmem:[%s632 + $0x38] sm:$0xff]
        %v657 = vunpack.c.l.b16 %v613
        %v658 = vunpack.c.l.b16 %v614
        %v659 = vunpack.c.l.b16 %v615
        %v660 = vunpack.c.l.b16 %v616
        %v661 = vunpack.c.l.b16 %v617
        %v662 = vunpack.c.l.b16 %v618
        %v663 = vunpack.c.l.b16 %v619
        %v664 = vunpack.c.l.b16 %v620
        %v665 = vunpack.c.l.b16 %v621
        %v666 = vunpack.c.l.b16 %v622
        %v667 = vunpack.c.l.b16 %v623
        %v668 = vunpack.c.l.b16 %v624
        %v669 = vunpack.c.l.b16 %v625
        %v670 = vunpack.c.l.b16 %v626
        %v671 = vunpack.c.l.b16 %v627
        %v672 = vunpack.c.l.b16 %v628
        %v673 = vpack.c.b16 %v658, %v657
        %v674 = vpack.c.b16 %v660, %v659
        %v675 = vpack.c.b16 %v662, %v661
        %v676 = vpack.c.b16 %v664, %v663
        %v677 = vpack.c.b16 %v666, %v665
        %v678 = vpack.c.b16 %v668, %v667
        %v679 = vpack.c.b16 %v670, %v669
        %v680 = vpack.c.b16 %v672, %v671
        %689 = vmatprep.subr.bf16.mxu0 0
        %690 = vmatpush1.bf16.msra.mxu0 %v633
        %691 = vmatprep.subr.bf16.mxu0 0
        %692 = vmatpush1.bf16.msra.mxu0 %v634
        %693 = vmatprep.subr.bf16.mxu0 0
        %694 = vmatpush1.bf16.msra.mxu0 %v635
        %695 = vmatprep.subr.bf16.mxu0 0
        %696 = vmatpush1.bf16.msra.mxu0 %v636
        %697 = vmatprep.subr.bf16.mxu0 0
        %698 = vmatpush1.bf16.msra.mxu0 %v637
        %699 = vmatprep.subr.bf16.mxu0 0
        %700 = vmatpush1.bf16.msra.mxu0 %v638
        %701 = vmatprep.subr.bf16.mxu0 0
        %702 = vmatpush1.bf16.msra.mxu0 %v639
        %703 = vmatprep.subr.bf16.mxu0 0
        %704 = vmatpush1.bf16.msra.mxu0 %v640
        %705 = vmatprep.subr.bf16.mxu0 0
        %706 = vmatpush1.bf16.msra.mxu0 0
        %707 = vmatprep.subr.bf16.mxu0 0
        %708 = vmatpush1.bf16.msra.mxu0 0
        %709 = vmatprep.subr.bf16.mxu0 0
        %710 = vmatpush1.bf16.msra.mxu0 0
        %711 = vmatprep.subr.bf16.mxu0 0
        %712 = vmatpush1.bf16.msra.mxu0 0
        %713 = vmatprep.subr.bf16.mxu0 0
        %714 = vmatpush1.bf16.msra.mxu0 0
        %715 = vmatprep.subr.bf16.mxu0 0
        %716 = vmatpush1.bf16.msra.mxu0 0
        %717 = vmatprep.subr.bf16.mxu0 0
        %718 = vmatpush1.bf16.msra.mxu0 0
        %719 = vmatprep.subr.bf16.mxu0 0
        %720 = vmatpush1.bf16.msra.mxu0 0
        %721 = vmatprep.mubr.bf16.mxu0 0
        %722 = vmatmul.mubr.bf16.gmra.mrb[0].mxu0 %v673
        %v723 = vpop.f32.mrb[0].mxu0
        %v724 = vadd.f32 0.0, %v723
        %v725 = vpop.f32.mrb[0].mxu0
        %v726 = vpop.f32.mrb[0].mxu0
        %v727 = vadd.f32 0.0, %v726
        %v728 = vpop.f32.mrb[0].mxu0
        %729 = vmatprep.mubr.bf16.mxu0 0
        %730 = vmatmul.mubr.bf16.gmra.mrb[0].mxu0 %v674
        %v731 = vpop.f32.mrb[0].mxu0
        %v732 = vadd.f32 0.0, %v731
        %v733 = vpop.f32.mrb[0].mxu0
        %v734 = vpop.f32.mrb[0].mxu0
        %v735 = vadd.f32 0.0, %v734
        %v736 = vpop.f32.mrb[0].mxu0
        %737 = vmatprep.mubr.bf16.mxu0 0
        %738 = vmatmul.mubr.bf16.gmra.mrb[0].mxu0 %v675
        %v739 = vpop.f32.mrb[0].mxu0
        %v740 = vadd.f32 0.0, %v739
        %v741 = vpop.f32.mrb[0].mxu0
        %v742 = vpop.f32.mrb[0].mxu0
        %v743 = vadd.f32 0.0, %v742
        %v744 = vpop.f32.mrb[0].mxu0
        %745 = vmatprep.mubr.bf16.mxu0 0
        %746 = vmatmul.mubr.bf16.gmra.mrb[0].mxu0 %v676
        %v747 = vpop.f32.mrb[0].mxu0
        %v748 = vadd.f32 0.0, %v747
        %v749 = vpop.f32.mrb[0].mxu0
        %v750 = vpop.f32.mrb[0].mxu0
        %v751 = vadd.f32 0.0, %v750
        %v752 = vpop.f32.mrb[0].mxu0
        %753 = vmatprep.mubr.bf16.mxu0 0
        %754 = vmatmul.mubr.bf16.gmra.mrb[0].mxu0 %v677
        %v755 = vpop.f32.mrb[0].mxu0
        %v756 = vadd.f32 0.0, %v755
        %v757 = vpop.f32.mrb[0].mxu0
        %v758 = vpop.f32.mrb[0].mxu0
        %v759 = vadd.f32 0.0, %v758
        %v760 = vpop.f32.mrb[0].mxu0
        %761 = vmatprep.mubr.bf16.mxu0 0
        %762 = vmatmul.mubr.bf16.gmra.mrb[0].mxu0 %v678
        %v763 = vpop.f32.mrb[0].mxu0
        %v764 = vadd.f32 0.0, %v763
        %v765 = vpop.f32.mrb[0].mxu0
        %v766 = vpop.f32.mrb[0].mxu0
        %v767 = vadd.f32 0.0, %v766
        %v768 = vpop.f32.mrb[0].mxu0
        %769 = vmatprep.mubr.bf16.mxu0 0
        %770 = vmatmul.mubr.bf16.gmra.mrb[0].mxu0 %v679
        %v771 = vpop.f32.mrb[0].mxu0
        %v772 = vadd.f32 0.0, %v771
        %v773 = vpop.f32.mrb[0].mxu0
        %v774 = vpop.f32.mrb[0].mxu0
        %v775 = vadd.f32 0.0, %v774
        %v776 = vpop.f32.mrb[0].mxu0
        %777 = vmatprep.mubr.bf16.mxu0 0
        %778 = vmatmul.mubr.bf16.gmra.mrb[0].mxu0 %v680
        %v779 = vpop.f32.mrb[0].mxu0
        %v780 = vadd.f32 0.0, %v779
        %v781 = vpop.f32.mrb[0].mxu0
        %v782 = vpop.f32.mrb[0].mxu0
        %v783 = vadd.f32 0.0, %v782
        %v784 = vpop.f32.mrb[0].mxu0
        %785 = vdwg.mxu0
        %v786 = vadd.f32 %v597, %v724
        %v787 = vadd.f32 %v598, %v727
        %v788 = vadd.f32 %v599, %v732
        %v789 = vadd.f32 %v600, %v735
        %v790 = vadd.f32 %v601, %v740
        %v791 = vadd.f32 %v602, %v743
        %v792 = vadd.f32 %v603, %v748
        %v793 = vadd.f32 %v604, %v751
        %v794 = vadd.f32 %v605, %v756
        %v795 = vadd.f32 %v606, %v759
        %v796 = vadd.f32 %v607, %v764
        %v797 = vadd.f32 %v608, %v767
        %v798 = vadd.f32 %v609, %v772
        %v799 = vadd.f32 %v610, %v775
        %v800 = vadd.f32 %v611, %v780
        %v801 = vadd.f32 %v612, %v783
        %802 = vst [vmem:[#allocation2] sm:$0xff] %v786
        %803 = vst [vmem:[#allocation2 + $0x8] sm:$0xff] %v787
        %804 = vst [vmem:[#allocation2 + $0x10] sm:$0xff] %v788
        %805 = vst [vmem:[#allocation2 + $0x18] sm:$0xff] %v789
        %806 = vst [vmem:[#allocation2 + $0x20] sm:$0xff] %v790
        %807 = vst [vmem:[#allocation2 + $0x28] sm:$0xff] %v791
        %808 = vst [vmem:[#allocation2 + $0x30] sm:$0xff] %v792
        %809 = vst [vmem:[#allocation2 + $0x38] sm:$0xff] %v793
        %810 = vst [vmem:[#allocation2 + $0x40] sm:$0xff] %v794
        %811 = vst [vmem:[#allocation2 + $0x48] sm:$0xff] %v795
        %812 = vst [vmem:[#allocation2 + $0x50] sm:$0xff] %v796
        %813 = vst [vmem:[#allocation2 + $0x58] sm:$0xff] %v797
        %814 = vst [vmem:[#allocation2 + $0x60] sm:$0xff] %v798
        %815 = vst [vmem:[#allocation2 + $0x68] sm:$0xff] %v799
        %816 = vst [vmem:[#allocation2 + $0x70] sm:$0xff] %v800
        %817 = vst [vmem:[#allocation2 + $0x78] sm:$0xff] %v801
      $region52: #{gcn_flatten_emp_forward.1} parent=39 // pred_fallthru
        _
      %p818 = pnand %p315, %p295
      %p819 = pneg %p818
      // Predicated region
      $region53: #{gcn_flatten_emp_forward.1} parent=39 // pred_check
        _
      $region54: #{gcn_flatten_emp_forward.1} parent=39 // pred_check_branch
        %821 = sbr.rel (%p818) target = $region56
      $region55: #{gcn_flatten_emp_forward.1} parent=39 // pred_region
        %v822 = vld [vmem:[#allocation2] sm:$0xff]
        %v823 = vld [vmem:[#allocation2 + $0x8] sm:$0xff]
        %v824 = vld [vmem:[#allocation2 + $0x10] sm:$0xff]
        %v825 = vld [vmem:[#allocation2 + $0x18] sm:$0xff]
        %v826 = vld [vmem:[#allocation2 + $0x20] sm:$0xff]
        %v827 = vld [vmem:[#allocation2 + $0x28] sm:$0xff]
        %v828 = vld [vmem:[#allocation2 + $0x30] sm:$0xff]
        %v829 = vld [vmem:[#allocation2 + $0x38] sm:$0xff]
        %v830 = vld [vmem:[#allocation2 + $0x40] sm:$0xff]
        %v831 = vld [vmem:[#allocation2 + $0x48] sm:$0xff]
        %v832 = vld [vmem:[#allocation2 + $0x50] sm:$0xff]
        %v833 = vld [vmem:[#allocation2 + $0x58] sm:$0xff]
        %v834 = vld [vmem:[#allocation2 + $0x60] sm:$0xff]
        %v835 = vld [vmem:[#allocation2 + $0x68] sm:$0xff]
        %v836 = vld [vmem:[#allocation2 + $0x70] sm:$0xff]
        %v837 = vld [vmem:[#allocation2 + $0x78] sm:$0xff]
        %v838 = vld [vmem:[%s3] sm:$0x1]
        %v840 = vlaneseq
        %v841 = vshrl.u32 %v840, 7
        %v842 = vsub.s32 0, %v841
        %v843 = vrot.slane %v838, %v842
        %v845 = vadd.f32 %v822, %v843
        %v846 = vadd.f32 %v823, %v843
        %v847 = vadd.f32 %v824, %v843
        %v848 = vadd.f32 %v825, %v843
        %v849 = vadd.f32 %v826, %v843
        %v850 = vadd.f32 %v827, %v843
        %v851 = vadd.f32 %v828, %v843
        %v852 = vadd.f32 %v829, %v843
        %v853 = vadd.f32 %v830, %v843
        %v854 = vadd.f32 %v831, %v843
        %v855 = vadd.f32 %v832, %v843
        %v856 = vadd.f32 %v833, %v843
        %v857 = vadd.f32 %v834, %v843
        %v858 = vadd.f32 %v835, %v843
        %v859 = vadd.f32 %v836, %v843
        %v860 = vadd.f32 %v837, %v843
        %v861 = vmax.f32 %v845, 0.0
        %v862 = vmax.f32 %v846, 0.0
        %v863 = vmax.f32 %v847, 0.0
        %v864 = vmax.f32 %v848, 0.0
        %v865 = vmax.f32 %v849, 0.0
        %v866 = vmax.f32 %v850, 0.0
        %v867 = vmax.f32 %v851, 0.0
        %v868 = vmax.f32 %v852, 0.0
        %v869 = vmax.f32 %v853, 0.0
        %v870 = vmax.f32 %v854, 0.0
        %v871 = vmax.f32 %v855, 0.0
        %v872 = vmax.f32 %v856, 0.0
        %v873 = vmax.f32 %v857, 0.0
        %v874 = vmax.f32 %v858, 0.0
        %v875 = vmax.f32 %v859, 0.0
        %v876 = vmax.f32 %v860, 0.0
        %s877 = smul.u32 %s22, 128
        %v878 = vpack.c.bf16 %v862, %v861
        %v879 = vpack.c.bf16 %v864, %v863
        %v880 = vpack.c.bf16 %v866, %v865
        %v881 = vpack.c.bf16 %v868, %v867
        %v882 = vpack.c.bf16 %v870, %v869
        %v883 = vpack.c.bf16 %v872, %v871
        %v884 = vpack.c.bf16 %v874, %v873
        %v885 = vpack.c.bf16 %v876, %v875
        %v886 = vld [vmem:[%s2] sm:$0xf]
        %v887 = vld [vmem:[%s2 + $0x4] sm:$0xf]
        %v888 = vld [vmem:[%s2 + $0x8] sm:$0xf]
        %v889 = vld [vmem:[%s2 + $0xc] sm:$0xf]
        %v890 = vld [vmem:[%s2 + $0x10] sm:$0xf]
        %v891 = vld [vmem:[%s2 + $0x14] sm:$0xf]
        %v892 = vld [vmem:[%s2 + $0x18] sm:$0xf]
        %v893 = vld [vmem:[%s2 + $0x1c] sm:$0xf]
        %v894 = vld [vmem:[%s2 + $0x20] sm:$0xf]
        %v895 = vld [vmem:[%s2 + $0x24] sm:$0xf]
        %v896 = vld [vmem:[%s2 + $0x28] sm:$0xf]
        %v897 = vld [vmem:[%s2 + $0x2c] sm:$0xf]
        %v898 = vld [vmem:[%s2 + $0x30] sm:$0xf]
        %v899 = vld [vmem:[%s2 + $0x34] sm:$0xf]
        %v900 = vld [vmem:[%s2 + $0x38] sm:$0xf]
        %v901 = vld [vmem:[%s2 + $0x3c] sm:$0xf]
        %v918 = vunpack.c.l.b16 %v886
        %v919 = vunpack.c.l.b16 %v887
        %v920 = vunpack.c.l.b16 %v888
        %v921 = vunpack.c.l.b16 %v889
        %v922 = vunpack.c.l.b16 %v890
        %v923 = vunpack.c.l.b16 %v891
        %v924 = vunpack.c.l.b16 %v892
        %v925 = vunpack.c.l.b16 %v893
        %v926 = vunpack.c.l.b16 %v894
        %v927 = vunpack.c.l.b16 %v895
        %v928 = vunpack.c.l.b16 %v896
        %v929 = vunpack.c.l.b16 %v897
        %v930 = vunpack.c.l.b16 %v898
        %v931 = vunpack.c.l.b16 %v899
        %v932 = vunpack.c.l.b16 %v900
        %v933 = vunpack.c.l.b16 %v901
        %v934 = vpack.c.b16 %v919, %v918
        %v935 = vpack.c.b16 %v921, %v920
        %v936 = vpack.c.b16 %v923, %v922
        %v937 = vpack.c.b16 %v925, %v924
        %v938 = vpack.c.b16 %v927, %v926
        %v939 = vpack.c.b16 %v929, %v928
        %v940 = vpack.c.b16 %v931, %v930
        %v941 = vpack.c.b16 %v933, %v932
        %950 = vmatprep.subr.bf16.mxu0 0
        %951 = vmatpush1.bf16.msra.mxu0 %v934
        %952 = vmatprep.subr.bf16.mxu0 0
        %953 = vmatpush1.bf16.msra.mxu0 %v935
        %954 = vmatprep.subr.bf16.mxu0 0
        %955 = vmatpush1.bf16.msra.mxu0 %v936
        %956 = vmatprep.subr.bf16.mxu0 0
        %957 = vmatpush1.bf16.msra.mxu0 %v937
        %958 = vmatprep.subr.bf16.mxu0 0
        %959 = vmatpush1.bf16.msra.mxu0 %v938
        %960 = vmatprep.subr.bf16.mxu0 0
        %961 = vmatpush1.bf16.msra.mxu0 %v939
        %962 = vmatprep.subr.bf16.mxu0 0
        %963 = vmatpush1.bf16.msra.mxu0 %v940
        %964 = vmatprep.subr.bf16.mxu0 0
        %965 = vmatpush1.bf16.msra.mxu0 %v941
        %966 = vmatprep.subr.bf16.mxu0 0
        %967 = vmatpush1.bf16.msra.mxu0 0
        %968 = vmatprep.subr.bf16.mxu0 0
        %969 = vmatpush1.bf16.msra.mxu0 0
        %970 = vmatprep.subr.bf16.mxu0 0
        %971 = vmatpush1.bf16.msra.mxu0 0
        %972 = vmatprep.subr.bf16.mxu0 0
        %973 = vmatpush1.bf16.msra.mxu0 0
        %974 = vmatprep.subr.bf16.mxu0 0
        %975 = vmatpush1.bf16.msra.mxu0 0
        %976 = vmatprep.subr.bf16.mxu0 0
        %977 = vmatpush1.bf16.msra.mxu0 0
        %978 = vmatprep.subr.bf16.mxu0 0
        %979 = vmatpush1.bf16.msra.mxu0 0
        %980 = vmatprep.subr.bf16.mxu0 0
        %981 = vmatpush1.bf16.msra.mxu0 0
        %982 = vmatprep.mubr.bf16.mxu0 0
        %983 = vmatmul.mubr.bf16.gmra.mrb[0].mxu0 %v878
        %v984 = vpop.f32.mrb[0].mxu0
        %v985 = vadd.f32 0.0, %v984
        %v986 = vpop.f32.mrb[0].mxu0
        %v987 = vpop.f32.mrb[0].mxu0
        %v988 = vadd.f32 0.0, %v987
        %v989 = vpop.f32.mrb[0].mxu0
        %990 = vmatprep.mubr.bf16.mxu0 0
        %991 = vmatmul.mubr.bf16.gmra.mrb[0].mxu0 %v879
        %v992 = vpop.f32.mrb[0].mxu0
        %v993 = vadd.f32 0.0, %v992
        %v994 = vpop.f32.mrb[0].mxu0
        %v995 = vpop.f32.mrb[0].mxu0
        %v996 = vadd.f32 0.0, %v995
        %v997 = vpop.f32.mrb[0].mxu0
        %998 = vmatprep.mubr.bf16.mxu0 0
        %999 = vmatmul.mubr.bf16.gmra.mrb[0].mxu0 %v880
        %v1000 = vpop.f32.mrb[0].mxu0
        %v1001 = vadd.f32 0.0, %v1000
        %v1002 = vpop.f32.mrb[0].mxu0
        %v1003 = vpop.f32.mrb[0].mxu0
        %v1004 = vadd.f32 0.0, %v1003
        %v1005 = vpop.f32.mrb[0].mxu0
        %1006 = vmatprep.mubr.bf16.mxu0 0
        %1007 = vmatmul.mubr.bf16.gmra.mrb[0].mxu0 %v881
        %v1008 = vpop.f32.mrb[0].mxu0
        %v1009 = vadd.f32 0.0, %v1008
        %v1010 = vpop.f32.mrb[0].mxu0
        %v1011 = vpop.f32.mrb[0].mxu0
        %v1012 = vadd.f32 0.0, %v1011
        %v1013 = vpop.f32.mrb[0].mxu0
        %1014 = vmatprep.mubr.bf16.mxu0 0
        %1015 = vmatmul.mubr.bf16.gmra.mrb[0].mxu0 %v882
        %v1016 = vpop.f32.mrb[0].mxu0
        %v1017 = vadd.f32 0.0, %v1016
        %v1018 = vpop.f32.mrb[0].mxu0
        %v1019 = vpop.f32.mrb[0].mxu0
        %v1020 = vadd.f32 0.0, %v1019
        %v1021 = vpop.f32.mrb[0].mxu0
        %1022 = vmatprep.mubr.bf16.mxu0 0
        %1023 = vmatmul.mubr.bf16.gmra.mrb[0].mxu0 %v883
        %v1024 = vpop.f32.mrb[0].mxu0
        %v1025 = vadd.f32 0.0, %v1024
        %v1026 = vpop.f32.mrb[0].mxu0
        %v1027 = vpop.f32.mrb[0].mxu0
        %v1028 = vadd.f32 0.0, %v1027
        %v1029 = vpop.f32.mrb[0].mxu0
        %1030 = vmatprep.mubr.bf16.mxu0 0
        %1031 = vmatmul.mubr.bf16.gmra.mrb[0].mxu0 %v884
        %v1032 = vpop.f32.mrb[0].mxu0
        %v1033 = vadd.f32 0.0, %v1032
        %v1034 = vpop.f32.mrb[0].mxu0
        %v1035 = vpop.f32.mrb[0].mxu0
        %v1036 = vadd.f32 0.0, %v1035
        %v1037 = vpop.f32.mrb[0].mxu0
        %1038 = vmatprep.mubr.bf16.mxu0 0
        %1039 = vmatmul.mubr.bf16.gmra.mrb[0].mxu0 %v885
        %v1040 = vpop.f32.mrb[0].mxu0
        %v1041 = vadd.f32 0.0, %v1040
        %v1042 = vpop.f32.mrb[0].mxu0
        %v1043 = vpop.f32.mrb[0].mxu0
        %v1044 = vadd.f32 0.0, %v1043
        %v1045 = vpop.f32.mrb[0].mxu0
        %1046 = vdwg.mxu0
        %v1047 = vpack.c.bf16 %v988, %v985
        %v1048 = vpack.c.bf16 %v996, %v993
        %v1049 = vpack.c.bf16 %v1004, %v1001
        %v1050 = vpack.c.bf16 %v1012, %v1009
        %v1051 = vpack.c.bf16 %v1020, %v1017
        %v1052 = vpack.c.bf16 %v1028, %v1025
        %v1053 = vpack.c.bf16 %v1036, %v1033
        %v1054 = vpack.c.bf16 %v1044, %v1041
        %s1055 = sshra.s32 %s877, 4
        %s1056 = sand.u32 %s877, 15
        %s1057 = smul.addr %s1055, 8
        %s1058 = scalar_lea.vmem [#allocation3], %s1057
        %1059 = vst [vmem:[%s1058] sm:$0xff] %v1047
        %1060 = vst [vmem:[%s1058 + $0x8] sm:$0xff] %v1048
        %1061 = vst [vmem:[%s1058 + $0x10] sm:$0xff] %v1049
        %1062 = vst [vmem:[%s1058 + $0x18] sm:$0xff] %v1050
        %1063 = vst [vmem:[%s1058 + $0x20] sm:$0xff] %v1051
        %1064 = vst [vmem:[%s1058 + $0x28] sm:$0xff] %v1052
        %1065 = vst [vmem:[%s1058 + $0x30] sm:$0xff] %v1053
        %1066 = vst [vmem:[%s1058 + $0x38] sm:$0xff] %v1054
        %1067 = vst [vmem:[%s292] sm:$0xff] 0.0
        %1068 = vst [vmem:[%s292 + $0x8] sm:$0xff] 0.0
        %1069 = vst [vmem:[%s292 + $0x10] sm:$0xff] 0.0
        %1070 = vst [vmem:[%s292 + $0x18] sm:$0xff] 0.0
        %1071 = vst [vmem:[%s292 + $0x20] sm:$0xff] 0.0
        %1072 = vst [vmem:[%s292 + $0x28] sm:$0xff] 0.0
        %1073 = vst [vmem:[%s292 + $0x30] sm:$0xff] 0.0
        %1074 = vst [vmem:[%s292 + $0x38] sm:$0xff] 0.0
        %1075 = vst [vmem:[%s292 + $0x40] sm:$0xff] 0.0
        %1076 = vst [vmem:[%s292 + $0x48] sm:$0xff] 0.0
        %1077 = vst [vmem:[%s292 + $0x50] sm:$0xff] 0.0
        %1078 = vst [vmem:[%s292 + $0x58] sm:$0xff] 0.0
        %1079 = vst [vmem:[%s292 + $0x60] sm:$0xff] 0.0
        %1080 = vst [vmem:[%s292 + $0x68] sm:$0xff] 0.0
        %1081 = vst [vmem:[%s292 + $0x70] sm:$0xff] 0.0
        %1082 = vst [vmem:[%s292 + $0x78] sm:$0xff] 0.0
      $region56: #{gcn_flatten_emp_forward.1} parent=39 // pred_fallthru
        _
      %p1083 = pnand %p592, %p295
      %p1084 = pneg %p1083
      // Predicated region
      $region57: #{gcn_flatten_emp_forward.1} parent=39 // pred_check
        _
      $region58: #{gcn_flatten_emp_forward.1} parent=39 // pred_check_branch
        %1086 = sbr.rel (%p1083) target = $region60
      $region59: #{gcn_flatten_emp_forward.1} parent=39 // pred_region
        %v1087 = vld [vmem:[#allocation2] sm:$0xff]
        %v1088 = vld [vmem:[#allocation2 + $0x8] sm:$0xff]
        %v1089 = vld [vmem:[#allocation2 + $0x10] sm:$0xff]
        %v1090 = vld [vmem:[#allocation2 + $0x18] sm:$0xff]
        %v1091 = vld [vmem:[#allocation2 + $0x20] sm:$0xff]
        %v1092 = vld [vmem:[#allocation2 + $0x28] sm:$0xff]
        %v1093 = vld [vmem:[#allocation2 + $0x30] sm:$0xff]
        %v1094 = vld [vmem:[#allocation2 + $0x38] sm:$0xff]
        %v1095 = vld [vmem:[#allocation2 + $0x40] sm:$0xff]
        %v1096 = vld [vmem:[#allocation2 + $0x48] sm:$0xff]
        %v1097 = vld [vmem:[#allocation2 + $0x50] sm:$0xff]
        %v1098 = vld [vmem:[#allocation2 + $0x58] sm:$0xff]
        %v1099 = vld [vmem:[#allocation2 + $0x60] sm:$0xff]
        %v1100 = vld [vmem:[#allocation2 + $0x68] sm:$0xff]
        %v1101 = vld [vmem:[#allocation2 + $0x70] sm:$0xff]
        %v1102 = vld [vmem:[#allocation2 + $0x78] sm:$0xff]
        %v1103 = vld [vmem:[%s4] sm:$0x1]
        %v1105 = vlaneseq
        %v1106 = vshrl.u32 %v1105, 7
        %v1107 = vsub.s32 0, %v1106
        %v1108 = vrot.slane %v1103, %v1107
        %v1110 = vadd.f32 %v1087, %v1108
        %v1111 = vadd.f32 %v1088, %v1108
        %v1112 = vadd.f32 %v1089, %v1108
        %v1113 = vadd.f32 %v1090, %v1108
        %v1114 = vadd.f32 %v1091, %v1108
        %v1115 = vadd.f32 %v1092, %v1108
        %v1116 = vadd.f32 %v1093, %v1108
        %v1117 = vadd.f32 %v1094, %v1108
        %v1118 = vadd.f32 %v1095, %v1108
        %v1119 = vadd.f32 %v1096, %v1108
        %v1120 = vadd.f32 %v1097, %v1108
        %v1121 = vadd.f32 %v1098, %v1108
        %v1122 = vadd.f32 %v1099, %v1108
        %v1123 = vadd.f32 %v1100, %v1108
        %v1124 = vadd.f32 %v1101, %v1108
        %v1125 = vadd.f32 %v1102, %v1108
        %1126 = vst [vmem:[%s292] sm:$0xff] %v1110
        %1127 = vst [vmem:[%s292 + $0x8] sm:$0xff] %v1111
        %1128 = vst [vmem:[%s292 + $0x10] sm:$0xff] %v1112
        %1129 = vst [vmem:[%s292 + $0x18] sm:$0xff] %v1113
        %1130 = vst [vmem:[%s292 + $0x20] sm:$0xff] %v1114
        %1131 = vst [vmem:[%s292 + $0x28] sm:$0xff] %v1115
        %1132 = vst [vmem:[%s292 + $0x30] sm:$0xff] %v1116
        %1133 = vst [vmem:[%s292 + $0x38] sm:$0xff] %v1117
        %1134 = vst [vmem:[%s292 + $0x40] sm:$0xff] %v1118
        %1135 = vst [vmem:[%s292 + $0x48] sm:$0xff] %v1119
        %1136 = vst [vmem:[%s292 + $0x50] sm:$0xff] %v1120
        %1137 = vst [vmem:[%s292 + $0x58] sm:$0xff] %v1121
        %1138 = vst [vmem:[%s292 + $0x60] sm:$0xff] %v1122
        %1139 = vst [vmem:[%s292 + $0x68] sm:$0xff] %v1123
        %1140 = vst [vmem:[%s292 + $0x70] sm:$0xff] %v1124
        %1141 = vst [vmem:[%s292 + $0x78] sm:$0xff] %v1125
      $region60: #{gcn_flatten_emp_forward.1} parent=39 // pred_fallthru
        _
      %s1142 = smul.u32 16, %s22
      %p1143 = scmp.lt.s32.totalorder %s1142, 15
      %s1144 = scalar_select %p1143, %s1142, 15
      %s1145 = smul.addr %s1144, 8
      %s1146 = scalar_lea.vmem %s5, %s1145
      // Predicated region
      $region61: #{gcn_flatten_emp_forward.1} parent=39 // pred_check
        %p1147 = pneg %p174
      $region62: #{gcn_flatten_emp_forward.1} parent=39 // pred_check_branch
        %1149 = sbr.rel (%p1147) target = $region64
      $region63: #{gcn_flatten_emp_forward.1} parent=39 // pred_region
        %s1150 = smul.u32 16, %s22
      $region64: #{gcn_flatten_emp_forward.1} parent=39 // pred_fallthru
        _
      // Predicated region
      $region65: #{gcn_flatten_emp_forward.1} parent=39 // pred_check
        %p1151 = pneg %p174
      $region66: #{gcn_flatten_emp_forward.1} parent=39 // pred_check_branch
        %1153 = sbr.rel (%p1151) target = $region68
      $region67: #{gcn_flatten_emp_forward.1} parent=39 // pred_region
        %s1154 = smul.u32 16, %s22
        %p1155 = scmp.lt.s32.totalorder %s1154, 15
        %s1156 = scalar_select %p1155, %s1154, 15
        %s1157 = smul.addr %s1156, 8
        %s1158 = scalar_lea.vmem %s5, %s1157
      $region68: #{gcn_flatten_emp_forward.1} parent=39 // pred_fallthru
        _
    $region40: #{gcn_flatten_emp_forward.1} parent=5 // pred_fallthru
      _
    %p1159 = scmp.le.s32.totalorder 2, %s11
    // Predicated region
    $region69: #{gcn_flatten_emp_forward.1} parent=5 // pred_check
      %p1160 = pneg %p1159
    $region70: #{gcn_flatten_emp_forward.1} parent=5 // pred_check_branch
      %1162 = sbr.rel (%p1160) target = $region72
    $region71: #{gcn_flatten_emp_forward.1} parent=5 // pred_region
      %s1163 = ssub.s32 %s11, 2
    $region72: #{gcn_flatten_emp_forward.1} parent=5 // pred_fallthru
      _
  $region6: #{gcn_flatten_emp_forward.1} parent=0 // loop_footer
    %s15 = sadd.s32 1, %s11
  $region7: #{gcn_flatten_emp_forward.1} parent=0 // loop_footer_branch
    %10 = sbr.rel target = $region3
  $region8: #{gcn_flatten_emp_forward.1} parent=0 // loop_exit
    _

</llo_original>
